<compile_context>
chip_gen: v6e
topology: v6e:2x2x1
jax: 0.10.0
libtpu: 0.0.40
codegen_flags: <defaults>
</compile_context>

<pallas_src>
import jax
import jax.numpy as jnp
from jax.experimental import pallas as pl
from jax.experimental.pallas import tpu as pltpu

_LANE = 128
_SUBLANE = 8
_MAX_TILE_ROWS = 1024                     # measured sweet spot 512-2048, capped for VMEM
_N_CORE_GROUPS = 2                        # per-TensorCore partial sums (v7x megacore)
_VMEM_LIMIT_BYTES = 32 * 1024 * 1024      # safe scoped limit on every generation
_STREAM_BUDGET_BYTES = 12 * 1024 * 1024   # budget for double-buffered streamed tiles


def _round_up(x: int, m: int) -> int:
    return (x + m - 1) // m * m


def _fold_factor(n_obs: int) -> int:
    """Rows folded into the lane axis so the last dim becomes lane-dense."""
    if n_obs % _LANE == 0:
        return 1
    if _LANE % n_obs == 0:
        return _LANE // n_obs
    return 1  # n_obs > 128 and not a multiple of 128: keep full-row blocks


def _pick_tile_rows(n_rows: int, n_lane: int) -> int:
    """Largest sublane-aligned row tile that fits the streamed-VMEM budget."""
    # 2 streamed operands x double buffer x 4 B/elem.
    by_vmem = _STREAM_BUDGET_BYTES // (4 * n_lane * 4)
    by_vmem = max(_SUBLANE, (by_vmem // _SUBLANE) * _SUBLANE)
    tile = min(_MAX_TILE_ROWS, by_vmem, _round_up(max(n_rows, 1), _SUBLANE))
    return max(_SUBLANE, (tile // _SUBLANE) * _SUBLANE)


# ---------------------------------------------------------------------------
# Kernels
# ---------------------------------------------------------------------------
def _update_sums_kernel(x_ref, mean_ref, s1_ref, s2_ref):
    """Accumulate S1 = sum(x - old_mean), S2 = sum((x - old_mean)^2) over row tiles."""
    @pl.when(pl.program_id(1) == 0)
    def _init():
        s1_ref[...] = jnp.zeros_like(s1_ref)
        s2_ref[...] = jnp.zeros_like(s2_ref)

    d = x_ref[...] - mean_ref[...]                         # (tile_rows, n_lane) f32
    s1_ref[...] += jnp.sum(d, axis=0, keepdims=True)[None]
    s2_ref[...] += jnp.sum(d * d, axis=0, keepdims=True)[None]


def _normalize_kernel(x_ref, mean_ref, var_ref, steps_ref, o_ref):
    """o = clip((x - mean) * rsqrt(clip(var / (steps + 1), 1e-6, 1e6)), -5, 5)."""
    count = steps_ref[0] + 1.0                             # SMEM scalar
    inv_std = jax.lax.rsqrt(jnp.clip(var_ref[...] / count, 1e-6, 1e6))  # (1, n_lane) EUP
    y = (x_ref[...].astype(jnp.float32) - mean_ref[...]) * inv_std
    o_ref[...] = jnp.clip(y, -5.0, 5.0).astype(o_ref.dtype)


# ---------------------------------------------------------------------------
# Module wrapper (plain-JAX glue: padding / fold reshapes + state bookkeeping)
# ---------------------------------------------------------------------------
class ObservationNormalization:
    """JAX/Pallas port of ObservationNormalizationModule (gradient-free buffers).

    Note: state (running_mean / running_variance / num_steps) is mutated on the
    Python object, mirroring the eager PyTorch module.  Under jax.jit, thread
    the state explicitly instead.
    """

    def __init__(self, n_obs: int, normalize_obs: bool = True):
        self.n_obs = n_obs
        self.normalize_obs = normalize_obs
        self._fold = _fold_factor(n_obs)
        self.num_steps = jnp.zeros((1,), jnp.float32)
        self.running_mean = jnp.zeros((n_obs,), jnp.float32)
        self.running_variance = jnp.zeros((n_obs,), jnp.float32)

    # -- forward -------------------------------------------------------------
    def __call__(self, x, running_update: bool = False):
        if self.normalize_obs:
            if running_update:
                self.update_normalization(x)
            return self.normalize(x)
        return x

    # -- update_normalization --------------------------------------------------
    def update_normalization(self, x):
        if not self.normalize_obs:
            return
        n, k = self.n_obs, self._fold
        n_lane = n * k
        xv = x.reshape(-1, n).astype(jnp.float32)
        b_rows = xv.shape[0]

        mean_row = self.running_mean.reshape(1, n)

        # Geometry: fold k rows into lanes, split folded rows over core groups,
        # stream tiles of the remainder along the "arbitrary" reduction axis.
        b_fold = -(-b_rows // k)
        tile = _pick_tile_rows(-(-b_fold // _N_CORE_GROUPS), n_lane)
        tiles_per_group = max(1, -(-b_fold // (_N_CORE_GROUPS * tile)))
        b_fold_pad = _N_CORE_GROUPS * tiles_per_group * tile
        rows_pad = b_fold_pad * k
        if rows_pad > b_rows:
            # Pad with the *old* mean so padded rows contribute exactly 0 to S1/S2.
            pad = jnp.broadcast_to(mean_row, (rows_pad - b_rows, n))
            xv = jnp.concatenate([xv, pad], axis=0)
        xf = xv.reshape(b_fold_pad, n_lane)               # free, lane-dense view
        mean_lane = jnp.tile(mean_row, (1, k))            # (1, n_lane)

        s1f, s2f = pl.pallas_call(
            _update_sums_kernel,
            out_shape=(
                jax.ShapeDtypeStruct((_N_CORE_GROUPS, 1, n_lane), jnp.float32),
                jax.ShapeDtypeStruct((_N_CORE_GROUPS, 1, n_lane), jnp.float32),
            ),
            grid=(_N_CORE_GROUPS, tiles_per_group),
            in_specs=[
                pl.BlockSpec((tile, n_lane),
                             lambda c, i: (c * tiles_per_group + i, 0)),
                pl.BlockSpec((1, n_lane), lambda c, i: (0, 0)),
            ],
            out_specs=(
                pl.BlockSpec((1, 1, n_lane), lambda c, i: (c, 0, 0)),
                pl.BlockSpec((1, 1, n_lane), lambda c, i: (c, 0, 0)),
            ),
            compiler_params=pltpu.CompilerParams(
                dimension_semantics=("parallel", "arbitrary"),
                vmem_limit_bytes=_VMEM_LIMIT_BYTES),
        )(xf, mean_lane)

        # O(n_obs) finalisation in plain JAX (combines core-group + fold partials).
        s1 = s1f.reshape(_N_CORE_GROUPS * k, n).sum(axis=0)
        s2 = s2f.reshape(_N_CORE_GROUPS * k, n).sum(axis=0)
        new_steps = self.num_steps + jnp.float32(b_rows)
        mean_diff = s1 / new_steps
        self.running_mean = self.running_mean + mean_diff
        self.running_variance = self.running_variance + (s2 - s1 * mean_diff)
        self.num_steps = new_steps

    # -- normalize --------------------------------------------------------------
    def normalize(self, x):
        orig_shape, orig_dtype = x.shape, x.dtype
        n, k = self.n_obs, self._fold
        n_lane = n * k
        xv = x.reshape(-1, n)
        b_rows = xv.shape[0]

        b_fold = -(-b_rows // k)
        tile = _pick_tile_rows(b_fold, n_lane)
        b_fold_pad = _round_up(b_fold, tile)
        rows_pad = b_fold_pad * k
        if rows_pad > b_rows:
            xv = jnp.concatenate(
                [xv, jnp.zeros((rows_pad - b_rows, n), xv.dtype)], axis=0)
        xf = xv.reshape(b_fold_pad, n_lane)
        mean_lane = jnp.tile(self.running_mean.reshape(1, n), (1, k))
        var_lane = jnp.tile(self.running_variance.reshape(1, n), (1, k))

        out = pl.pallas_call(
            _normalize_kernel,
            out_shape=jax.ShapeDtypeStruct((b_fold_pad, n_lane), orig_dtype),
            grid=(b_fold_pad // tile,),
            in_specs=[
                pl.BlockSpec((tile, n_lane), lambda i: (i, 0)),
                pl.BlockSpec((1, n_lane), lambda i: (0, 0)),
                pl.BlockSpec((1, n_lane), lambda i: (0, 0)),
                pl.BlockSpec(memory_space=pltpu.MemorySpace.SMEM),
            ],
            out_specs=pl.BlockSpec((tile, n_lane), lambda i: (i, 0)),
            compiler_params=pltpu.CompilerParams(
                dimension_semantics=("parallel",),
                vmem_limit_bytes=_VMEM_LIMIT_BYTES),
        )(xf, mean_lane, var_lane, self.num_steps)

        return out.reshape(rows_pad, n)[:b_rows].reshape(orig_shape)


# ---------------------------------------------------------------------------
# Pure-JAX reference (mirrors the PyTorch forward exactly) for verification
# ---------------------------------------------------------------------------
def _ref_forward(x, mean, var, steps, running_update):
    n_obs = mean.shape[0]
    if running_update:
        xv = x.reshape(-1, n_obs)
        steps = steps + xv.shape[0]
        d_old = xv - mean
        mean = mean + jnp.sum(d_old / steps, axis=0)
        d_new = xv - mean
        var = var + jnp.sum(d_new * d_old, axis=0)
    v = jnp.clip(var / (steps + 1.0), 1e-06, 1e06)
    y = jnp.clip((x - mean) / jnp.sqrt(v), -5.0, 5.0)
    return y, mean, var, steps


# ---------------------------------------------------------------------------
if __name__ == "__main__":
    key = jax.random.PRNGKey(0)
    n_obs = 32
    x1 = jax.random.normal(key, (16, n_obs), jnp.float32) * 2.0 + 1.0
    x2 = jax.random.normal(jax.random.fold_in(key, 1), (2, 7, n_obs), jnp.float32) * 0.5 - 0.25

    mod = ObservationNormalization(n_obs=n_obs, normalize_obs=True)

    # forward with running statistics update (even batch)
    y1 = mod(x1, running_update=True)
    # second update with odd row count / 3-D input (exercises padding + fold)
    y2 = mod(x2, running_update=True)
    # forward using the (now-updated) statistics, no update
    y3 = mod(x1, running_update=False)
    jax.block_until_ready((y1, y2, y3))

    # reference check
    rm = jnp.zeros((n_obs,), jnp.float32)
    rv = jnp.zeros((n_obs,), jnp.float32)
    rs = jnp.float32(0.0)
    r1, rm, rv, rs = _ref_forward(x1, rm, rv, rs, running_update=True)
    r2, rm, rv, rs = _ref_forward(x2, rm, rv, rs, running_update=True)
    r3, _, _, _ = _ref_forward(x1, rm, rv, rs, running_update=False)

    assert jnp.allclose(y1, r1, atol=1e-4, rtol=1e-4), "first running_update mismatch"
    assert jnp.allclose(y2, r2, atol=1e-4, rtol=1e-4), "second running_update mismatch"
    assert jnp.allclose(y3, r3, atol=1e-4, rtol=1e-4), "normalize-only mismatch"
    assert jnp.allclose(mod.running_mean, rm, atol=1e-4, rtol=1e-4), "running_mean mismatch"
    assert jnp.allclose(mod.running_variance, rv, atol=1e-3, rtol=1e-3), "running_variance mismatch"
    assert jnp.allclose(mod.num_steps[0], rs), "num_steps mismatch"

    print("KERNEL_OK")
</pallas_src>

<mosaic_0001>
module attributes {stable_mosaic.version = 11 : i64} {
  func.func @_update_sums_kernel(%arg0: i32, %arg1: i32, %arg2: memref<8x128xf32, #tpu.memory_space<vmem>>, %arg3: memref<1x128xf32, #tpu.memory_space<vmem>>, %arg4: memref<1x1x128xf32, #tpu.memory_space<vmem>>, %arg5: memref<1x1x128xf32, #tpu.memory_space<vmem>>) attributes {dimension_semantics = [#tpu.dimension_semantics<parallel>, #tpu.dimension_semantics<arbitrary>], iteration_bounds = array<i64: 2, 1>, scalar_prefetch = 0 : i64, scratch_operands = 0 : i64, tpu.core_type = #tpu.core_type<tc>, window_params = [{transform_indices = @transform_0, window_bounds = array<i64: 8, 128>}, {pipeline_mode = #tpu.pipeline_mode<synchronous>, transform_indices = @transform_1, window_bounds = array<i64: 1, 128>}, {transform_indices = @transform_2, window_bounds = array<i64: 1, 1, 128>}, {transform_indices = @transform_3, window_bounds = array<i64: 1, 1, 128>}]} {
    %c0_i32 = arith.constant 0 : i32
    %0 = arith.cmpi eq, %arg1, %c0_i32 : i32
    %1 = arith.extui %0 : i1 to i32
    %c0_i32_0 = arith.constant 0 : i32
    %2 = arith.cmpi ne, %1, %c0_i32_0 : i32
    scf.if %2 {
      %cst_17 = arith.constant 0.000000e+00 : f32
      %20 = vector.broadcast %cst_17 : f32 to vector<1x1x128xf32>
      %c0_18 = arith.constant 0 : index
      %c0_19 = arith.constant 0 : index
      %c0_20 = arith.constant 0 : index
      %21 = vector.load %arg4[%c0_18, %c0_19, %c0_20] : memref<1x1x128xf32, #tpu.memory_space<vmem>>, vector<1x1x128xf32>
      tpu.vector_store %arg4[%c0_18, %c0_19, %c0_20], %20 {strides = array<i32>} : memref<1x1x128xf32, #tpu.memory_space<vmem>>, vector<1x1x128xf32>,
      %cst_21 = arith.constant 0.000000e+00 : f32
      %22 = vector.broadcast %cst_21 : f32 to vector<1x1x128xf32>
      %c0_22 = arith.constant 0 : index
      %c0_23 = arith.constant 0 : index
      %c0_24 = arith.constant 0 : index
      %23 = vector.load %arg5[%c0_22, %c0_23, %c0_24] : memref<1x1x128xf32, #tpu.memory_space<vmem>>, vector<1x1x128xf32>
      tpu.vector_store %arg5[%c0_22, %c0_23, %c0_24], %22 {strides = array<i32>} : memref<1x1x128xf32, #tpu.memory_space<vmem>>, vector<1x1x128xf32>,
    } else {
    }
    %c0 = arith.constant 0 : index
    %c0_1 = arith.constant 0 : index
    %3 = vector.load %arg2[%c0, %c0_1] : memref<8x128xf32, #tpu.memory_space<vmem>>, vector<8x128xf32>
    %c0_2 = arith.constant 0 : index
    %c0_3 = arith.constant 0 : index
    %4 = vector.load %arg3[%c0_2, %c0_3] : memref<1x128xf32, #tpu.memory_space<vmem>>, vector<1x128xf32>
    %5 = vector.broadcast %4 : vector<1x128xf32> to vector<8x128xf32>
    %6 = arith.subf %3, %5 : vector<8x128xf32>
    %c0_4 = arith.constant 0 : index
    %c0_5 = arith.constant 0 : index
    %c0_6 = arith.constant 0 : index
    %7 = vector.load %arg4[%c0_4, %c0_5, %c0_6] : memref<1x1x128xf32, #tpu.memory_space<vmem>>, vector<1x1x128xf32>
    %cst = arith.constant dense<0.000000e+00> : vector<128xf32>
    %8 = vector.multi_reduction <add>, %6, %cst [0] : vector<8x128xf32> to vector<128xf32>
    %9 = vector.shape_cast %8 : vector<128xf32> to vector<1x128xf32>
    %10 = vector.shape_cast %9 : vector<1x128xf32> to vector<1x1x128xf32>
    %11 = arith.addf %7, %10 : vector<1x1x128xf32>
    %c0_7 = arith.constant 0 : index
    %c0_8 = arith.constant 0 : index
    %c0_9 = arith.constant 0 : index
    %12 = vector.load %arg4[%c0_7, %c0_8, %c0_9] : memref<1x1x128xf32, #tpu.memory_space<vmem>>, vector<1x1x128xf32>
    tpu.vector_store %arg4[%c0_7, %c0_8, %c0_9], %11 {strides = array<i32>} : memref<1x1x128xf32, #tpu.memory_space<vmem>>, vector<1x1x128xf32>,
    %c0_10 = arith.constant 0 : index
    %c0_11 = arith.constant 0 : index
    %c0_12 = arith.constant 0 : index
    %13 = vector.load %arg5[%c0_10, %c0_11, %c0_12] : memref<1x1x128xf32, #tpu.memory_space<vmem>>, vector<1x1x128xf32>
    %14 = arith.mulf %6, %6 : vector<8x128xf32>
    %cst_13 = arith.constant dense<0.000000e+00> : vector<128xf32>
    %15 = vector.multi_reduction <add>, %14, %cst_13 [0] : vector<8x128xf32> to vector<128xf32>
    %16 = vector.shape_cast %15 : vector<128xf32> to vector<1x128xf32>
    %17 = vector.shape_cast %16 : vector<1x128xf32> to vector<1x1x128xf32>
    %18 = arith.addf %13, %17 : vector<1x1x128xf32>
    %c0_14 = arith.constant 0 : index
    %c0_15 = arith.constant 0 : index
    %c0_16 = arith.constant 0 : index
    %19 = vector.load %arg5[%c0_14, %c0_15, %c0_16] : memref<1x1x128xf32, #tpu.memory_space<vmem>>, vector<1x1x128xf32>
    tpu.vector_store %arg5[%c0_14, %c0_15, %c0_16], %18 {strides = array<i32>} : memref<1x1x128xf32, #tpu.memory_space<vmem>>, vector<1x1x128xf32>,
    return
  }
  func.func @transform_0(%arg0: i32, %arg1: i32) -> (i32, i32) {
    %c1_i32 = arith.constant 1 : i32
    %0 = arith.muli %arg0, %c1_i32 : i32
    %1 = arith.addi %0, %arg1 : i32
    %c0_i32 = arith.constant 0 : i32
    %c0_i32_0 = arith.constant 0 : i32
    return %1, %c0_i32 : i32, i32
  }
  func.func @transform_1(%arg0: i32, %arg1: i32) -> (i32, i32) {
    %c0_i32 = arith.constant 0 : i32
    %c0_i32_0 = arith.constant 0 : i32
    %c0_i32_1 = arith.constant 0 : i32
    return %c0_i32, %c0_i32_0 : i32, i32
  }
  func.func @transform_2(%arg0: i32, %arg1: i32) -> (i32, i32, i32) {
    %c0_i32 = arith.constant 0 : i32
    %c0_i32_0 = arith.constant 0 : i32
    %c0_i32_1 = arith.constant 0 : i32
    return %arg0, %c0_i32, %c0_i32_0 : i32, i32, i32
  }
  func.func @transform_3(%arg0: i32, %arg1: i32) -> (i32, i32, i32) {
    %c0_i32 = arith.constant 0 : i32
    %c0_i32_0 = arith.constant 0 : i32
    %c0_i32_1 = arith.constant 0 : i32
    return %arg0, %c0_i32, %c0_i32_0 : i32, i32, i32
  }
}

</mosaic_0001>

<llo_original>
// kernel: tpu_custom_call.1
$region0: #{tpu_custom_call.1}
  #allocation0 [shape = 'u32[]', space=smem, size = 0x4, offset = 0x4, fixed_abs, tag = 'smem constant byte address 0x4 - core index']
  #allocation1 [shape = 'u32[144,128]{1,0:T(1,128)}', space=vmem, size = 0x12000, scoped, tag = 'internal scratch']
  %s0 = inlined_call_operand.hbm [shape: f32[16,128], index: 0, kind: input, shape index: {}]
  %s1 = inlined_call_operand.vmem [shape: f32[1,128], index: 1, kind: input, shape index: {}]
  %s2 = inlined_call_operand.hbm [shape: f32[2,1,128], index: 2, kind: output, shape index: {0}]
  %s3 = inlined_call_operand.hbm [shape: f32[2,1,128], index: 3, kind: output, shape index: {1}]
  %4 = xla_tuple %s2, %s3
  %s5 = sld [smem:[#allocation0]]
  $region57: #{tpu_custom_call.1} parent=0
    _
  %s7 = ssub.s32 1, %s5
  %s8 = scalar_select 0, %s7, %s5
  $region1: #{tpu_custom_call.1} parent=0
    #allocation2 [shape = 'u8[8192]{0}', space=vmem, size = 0x2000, scoped, tag = 'input window, operand 0']
    #allocation3 [shape = 's32[2]{0}', space=sflag, size = 0x8, scoped, tag = 'scoped memory for tpu_custom_call.1']
    #allocation4 [shape = 's32[2]{0}', space=sflag, size = 0x8, scoped, tag = 'scoped memory for tpu_custom_call.1']
    #allocation5 [shape = 'u8[1024]{0}', space=vmem, size = 0x400, scoped, tag = 'output window, operand 0']
    #allocation6 [shape = 'u8[1024]{0}', space=vmem, size = 0x400, scoped, tag = 'output window, operand 1']
    #allocation7 [shape = 's32[2]{0}', space=sflag, size = 0x8, scoped, tag = 'scoped memory for tpu_custom_call.1']
    %9 = vsyncpa [#allocation3], 0
    %s10 = scalar_lea.sflag [#allocation3], 1
    %11 = vsyncpa %s10, 0
    %12 = vsyncpa [#allocation4], 0
    %s13 = scalar_lea.sflag [#allocation4], 1
    %14 = vsyncpa %s13, 0
    %15 = vsyncpa [#allocation7], 0
    %s16 = scalar_lea.sflag [#allocation7], 1
    %17 = vsyncpa %s16, 0
    loop: start=0, step=1, limit=4
    $region2: #{tpu_custom_call.1} parent=1 // loop_pre_header
      _
    $region3: #{tpu_custom_call.1} parent=1 // loop_header
      %s19 = sphi 0, %s23
      %p20 = scmp.ge.s32.totalorder %s19, 4
      %s26 = sphi 0, %s38
      %s27 = sphi 0, %s34
      %s28 = sphi 0, %s26
      %s29 = sphi 0, %s27
      %s30 = sphi 0, %s28
      %s31 = sphi 0, %s29
      %s43 = sphi 0, %s45
      %s46 = sphi 0, %s43
      %s47 = sphi 0, %s46
      %s63 = sphi 0, %s47
      %s67 = sphi 0, %s67
      %s69 = sphi 0, %s67
      %s70 = sphi 0, %s69
      %s84 = sphi 0, %s70
      %s90 = sphi 0, %s92
      %s93 = sphi 0, %s90
      %s94 = sphi 0, %s93
      %s110 = sphi 0, %s94
      %s116 = sphi 0, %s118
      %s119 = sphi 0, %s116
      %s120 = sphi 0, %s119
      %s136 = sphi 0, %s120
    $region4: #{tpu_custom_call.1} parent=1 // loop_header_branch
      %22 = sbr.rel (%p20) target = $region8
    $region5: #{tpu_custom_call.1} parent=1 // loop_body
      %s24 = ssub.s32 %s19, 1
      %s25 = ssub.s32 %s19, 2
      %s32 = sadd.s32 1, %s27
      %p33 = scmp.ge.s32.totalorder %s32, 1
      %s34 = scalar_select %p33, 0, %s32
      %s35 = sadd.s32 1, %s26
      %s36 = scalar_select %p33, %s35, %s26
      %p37 = scmp.ge.s32.totalorder %s36, 2
      %s38 = scalar_select %p37, 0, %s36
      %s39 = sadd.s32 %s26, %s27
      %s40 = sadd.s32 %s38, %s34
      %s41 = ssub.s32 %s39, %s40
      %p42 = scmp.eq.s32.totalorder %s41, 0
      %s44 = sadd.s32 %s43, 1
      %s45 = scalar_select %p42, %s43, %s44
      %p48 = pneg %p42
      %p49 = scmp.eq.s32.totalorder %s19, 1
      %p50 = por %p48, %p49
      %p51 = scmp.ne.s32.totalorder %s43, %s46
      %p52 = scmp.eq.s32.totalorder %s19, 0
      %p53 = por %p51, %p52
      %p54 = scmp.ne.s32.totalorder %s43, %s46
      %p55 = scmp.eq.s32.totalorder %s24, 1
      %p56 = por %p54, %p55
      %p57 = scmp.ne.s32.totalorder %s46, %s47
      %p58 = scmp.eq.s32.totalorder %s24, 0
      %p59 = por %p57, %p58
      %p60 = scmp.ne.s32.totalorder %s46, %s47
      %p61 = scmp.eq.s32.totalorder %s25, 1
      %p62 = por %p60, %p61
      %p64 = scmp.ne.s32.totalorder %s47, %s63
      %p65 = scmp.eq.s32.totalorder %s25, 0
      %p66 = por %p64, %p65
      %s68 = sadd.s32 %s67, 1
      %p71 = scmp.eq.s32.totalorder %s19, 1
      %p72 = scmp.ne.s32.totalorder %s67, %s69
      %p73 = scmp.eq.s32.totalorder %s19, 0
      %p74 = por %p72, %p73
      %p75 = scmp.ne.s32.totalorder %s67, %s69
      %p76 = scmp.eq.s32.totalorder %s24, 1
      %p77 = por %p75, %p76
      %p78 = scmp.ne.s32.totalorder %s69, %s70
      %p79 = scmp.eq.s32.totalorder %s24, 0
      %p80 = por %p78, %p79
      %p81 = scmp.ne.s32.totalorder %s69, %s70
      %p82 = scmp.eq.s32.totalorder %s25, 1
      %p83 = por %p81, %p82
      %p85 = scmp.ne.s32.totalorder %s70, %s84
      %p86 = scmp.eq.s32.totalorder %s25, 0
      %p87 = por %p85, %p86
      %s88 = ssub.s32 %s26, %s38
      %p89 = scmp.eq.s32.totalorder %s88, 0
      %s91 = sadd.s32 %s90, 1
      %s92 = scalar_select %p89, %s90, %s91
      %p95 = pneg %p89
      %p96 = scmp.eq.s32.totalorder %s19, 1
      %p97 = por %p95, %p96
      %p98 = scmp.ne.s32.totalorder %s90, %s93
      %p99 = scmp.eq.s32.totalorder %s19, 0
      %p100 = por %p98, %p99
      %p101 = scmp.ne.s32.totalorder %s90, %s93
      %p102 = scmp.eq.s32.totalorder %s24, 1
      %p103 = por %p101, %p102
      %p104 = scmp.ne.s32.totalorder %s93, %s94
      %p105 = scmp.eq.s32.totalorder %s24, 0
      %p106 = por %p104, %p105
      %p107 = scmp.ne.s32.totalorder %s93, %s94
      %p108 = scmp.eq.s32.totalorder %s25, 1
      %p109 = por %p107, %p108
      %p111 = scmp.ne.s32.totalorder %s94, %s110
      %p112 = scmp.eq.s32.totalorder %s25, 0
      %p113 = por %p111, %p112
      %s114 = ssub.s32 %s26, %s38
      %p115 = scmp.eq.s32.totalorder %s114, 0
      %s117 = sadd.s32 %s116, 1
      %s118 = scalar_select %p115, %s116, %s117
      %p121 = pneg %p115
      %p122 = scmp.eq.s32.totalorder %s19, 1
      %p123 = por %p121, %p122
      %p124 = scmp.ne.s32.totalorder %s116, %s119
      %p125 = scmp.eq.s32.totalorder %s19, 0
      %p126 = por %p124, %p125
      %p127 = scmp.ne.s32.totalorder %s116, %s119
      %p128 = scmp.eq.s32.totalorder %s24, 1
      %p129 = por %p127, %p128
      %p130 = scmp.ne.s32.totalorder %s119, %s120
      %p131 = scmp.eq.s32.totalorder %s24, 0
      %p132 = por %p130, %p131
      %p133 = scmp.ne.s32.totalorder %s119, %s120
      %p134 = scmp.eq.s32.totalorder %s25, 1
      %p135 = por %p133, %p134
      %p137 = scmp.ne.s32.totalorder %s120, %s136
      %p138 = scmp.eq.s32.totalorder %s25, 0
      %p139 = por %p137, %p138
      %p140 = scmp.le.s32.totalorder 1, %s19
      %p141 = scmp.lt.s32.totalorder %s19, 3
      %p142 = pnand %p140, %p141
      %p143 = pneg %p142
      // Predicated region
      $region9: #{tpu_custom_call.1} parent=5 // pred_check
        _
      $region10: #{tpu_custom_call.1} parent=5 // pred_check_branch
        %145 = sbr.rel (%p142) target = $region12
      $region11: #{tpu_custom_call.1} parent=5 // pred_region
        %s146 = ssub.s32 %s19, 1
        // Predicated region
        $region13: #{tpu_custom_call.1} parent=11 // pred_check
          %p147 = pneg %p80
        $region14: #{tpu_custom_call.1} parent=11 // pred_check_branch
          %149 = sbr.rel (%p147) target = $region16
        $region15: #{tpu_custom_call.1} parent=11 // pred_region
          _
        $region16: #{tpu_custom_call.1} parent=11 // pred_fallthru
          _
      $region12: #{tpu_custom_call.1} parent=5 // pred_fallthru
        _
      %p150 = scmp.lt.s32.totalorder %s19, 2
      // Predicated region
      $region17: #{tpu_custom_call.1} parent=5 // pred_check
        %p151 = pneg %p150
      $region18: #{tpu_custom_call.1} parent=5 // pred_check_branch
        %153 = sbr.rel (%p151) target = $region20
      $region19: #{tpu_custom_call.1} parent=5 // pred_region
        // Predicated region
        $region21: #{tpu_custom_call.1} parent=19 // pred_check
          %p154 = pneg %p53
        $region22: #{tpu_custom_call.1} parent=19 // pred_check_branch
          %156 = sbr.rel (%p154) target = $region24
        $region23: #{tpu_custom_call.1} parent=19 // pred_region
          %s157 = sand.u32 %s43, 1
          %s158 = scalar_lea.sflag [#allocation3], %s157
          %s159 = sand.u32 %s43, 1
          %s160 = smul.addr %s159, 8
          %s161 = scalar_lea.vmem [#allocation2], %s160
          %s162 = sadd.s32 %s26, %s27
          %s164 = ssub.s32 128, 128
          %165 = vsyncadd %s158, %s164
          %s166 = smul.addr %s162, 128
          %s167 = scalar_lea.hbm %s0, %s166
          %s169 = sshll.u32 %s161, 4
          %s170 = int_to_ptr.vmem [resolvable:$true] %s169
          %172 = dma.hbm_to_vmem [thread:$0]  %s167, 128, %s170, %s158
        $region24: #{tpu_custom_call.1} parent=19 // pred_fallthru
          _
      $region20: #{tpu_custom_call.1} parent=5 // pred_fallthru
        _
      %p173 = scmp.le.s32.totalorder 1, %s19
      %p174 = scmp.lt.s32.totalorder %s19, 3
      %p175 = pnand %p173, %p174
      %p176 = pneg %p175
      // Predicated region
      $region25: #{tpu_custom_call.1} parent=5 // pred_check
        _
      $region26: #{tpu_custom_call.1} parent=5 // pred_check_branch
        %178 = sbr.rel (%p175) target = $region28
      $region27: #{tpu_custom_call.1} parent=5 // pred_region
        %s179 = ssub.s32 %s19, 1
        %s180 = sand.u32 %s46, 1
        %s181 = scalar_lea.sflag [#allocation3], %s180
        %s182 = sand.u32 %s46, 1
        %s183 = smul.addr %s182, 8
        %s184 = scalar_lea.vmem [#allocation2], %s183
        // Predicated region
        $region29: #{tpu_custom_call.1} parent=27 // pred_check
          %p185 = pneg %p59
        $region30: #{tpu_custom_call.1} parent=27 // pred_check_branch
          %187 = sbr.rel (%p185) target = $region32
        $region31: #{tpu_custom_call.1} parent=27 // pred_region
          %188 = dma.done %s181, 128
        $region32: #{tpu_custom_call.1} parent=27 // pred_fallthru
          _
        %s189 = sand.u32 %s46, 1
        %s190 = scalar_lea.sflag [#allocation3], %s189
        %s191 = sand.u32 %s46, 1
        %s192 = smul.addr %s191, 8
        %s193 = scalar_lea.vmem [#allocation2], %s192
        %p194 = pneg %p59
        %p195 = pneg %p56
        %p196 = pneg %p80
        %p197 = pneg %p77
        %p198 = pneg %p106
        %p199 = pneg %p103
        %s200 = sand.u32 %s93, 1
        %s201 = scalar_lea.sflag [#allocation4], %s200
        %s202 = sand.u32 %s93, 1
        %s203 = scalar_lea.vmem [#allocation5], %s202
        %p204 = pneg %p132
        %p205 = pneg %p129
        %s206 = sand.u32 %s119, 1
        %s207 = scalar_lea.sflag [#allocation7], %s206
        %s208 = sand.u32 %s119, 1
        %s209 = scalar_lea.vmem [#allocation6], %s208
        %s210 = sadd.s32 %s28, %s29
        %p211 = scmp.eq.s32.totalorder %s29, 0
        // Predicated region
        $region33: #{tpu_custom_call.1} parent=27 // pred_check
          %p212 = pneg %p211
        $region34: #{tpu_custom_call.1} parent=27 // pred_check_branch
          %214 = sbr.rel (%p212) target = $region36
        $region35: #{tpu_custom_call.1} parent=27 // pred_region
          %215 = vst [vmem:[%s203] sm:$0x1] 0.0
          %216 = vst [vmem:[%s209] sm:$0x1] 0.0
        $region36: #{tpu_custom_call.1} parent=27 // pred_fallthru
          _
        %v217 = vld [vmem:[%s184] sm:$0xff]
        %v218 = vld [vmem:[%s1] sm:$0x1]
        %v220 = vlaneseq
        %v221 = vshrl.u32 %v220, 7
        %v222 = vsub.s32 0, %v221
        %v223 = vrot.slane %v218, %v222
        %v225 = vsub.f32 %v217, %v223
        %v226 = vld [vmem:[%s203] sm:$0x1]
        %v227 = vrot.slane %v225, 4
        %v228 = vadd.f32 %v225, %v227
        %v229 = vrot.slane %v228, 2
        %v230 = vadd.f32 %v228, %v229
        %v231 = vrot.slane %v230, 1
        %v232 = vadd.f32 %v230, %v231
        %v233 = vadd.f32 %v226, %v232
        %234 = vst [vmem:[%s203] sm:$0x1] %v233
        %v235 = vld [vmem:[%s209] sm:$0x1]
        %v236 = vmul.f32 %v225, %v225
        %v237 = vrot.slane %v236, 4
        %v238 = vadd.f32 %v236, %v237
        %v239 = vrot.slane %v238, 2
        %v240 = vadd.f32 %v238, %v239
        %v241 = vrot.slane %v240, 1
        %v242 = vadd.f32 %v240, %v241
        %v243 = vadd.f32 %v235, %v242
        %244 = vst [vmem:[%s209] sm:$0x1] %v243
        %s245 = sand.u32 %s93, 1
        %s246 = scalar_lea.sflag [#allocation4], %s245
        %s247 = sand.u32 %s93, 1
        %s248 = scalar_lea.vmem [#allocation5], %s247
        %s249 = sand.u32 %s119, 1
        %s250 = scalar_lea.sflag [#allocation7], %s249
        %s251 = sand.u32 %s119, 1
        %s252 = scalar_lea.vmem [#allocation6], %s251
        // Predicated region
        $region37: #{tpu_custom_call.1} parent=27 // pred_check
          %p253 = pneg %p103
        $region38: #{tpu_custom_call.1} parent=27 // pred_check_branch
          %255 = sbr.rel (%p253) target = $region40
        $region39: #{tpu_custom_call.1} parent=27 // pred_region
          %s257 = ssub.s32 16, 16
          %258 = vsyncadd %s246, %s257
          %s259 = smul.addr %s28, 16
          %s260 = scalar_lea.hbm %s2, %s259
          %s262 = sshll.u32 %s248, 4
          %s263 = int_to_ptr.vmem [resolvable:$true] %s262
          %265 = dma.vmem_to_hbm [thread:$0]  %s263, 16, %s260, %s246
        $region40: #{tpu_custom_call.1} parent=27 // pred_fallthru
          _
        // Predicated region
        $region41: #{tpu_custom_call.1} parent=27 // pred_check
          %p266 = pneg %p129
        $region42: #{tpu_custom_call.1} parent=27 // pred_check_branch
          %268 = sbr.rel (%p266) target = $region44
        $region43: #{tpu_custom_call.1} parent=27 // pred_region
          %s270 = ssub.s32 16, 16
          %271 = vsyncadd %s250, %s270
          %s272 = smul.addr %s28, 16
          %s273 = scalar_lea.hbm %s3, %s272
          %s275 = sshll.u32 %s252, 4
          %s276 = int_to_ptr.vmem [resolvable:$true] %s275
          %278 = dma.vmem_to_hbm [thread:$0]  %s276, 16, %s273, %s250
        $region44: #{tpu_custom_call.1} parent=27 // pred_fallthru
          _
      $region28: #{tpu_custom_call.1} parent=5 // pred_fallthru
        _
      %p279 = scmp.le.s32.totalorder 2, %s19
      // Predicated region
      $region45: #{tpu_custom_call.1} parent=5 // pred_check
        %p280 = pneg %p279
      $region46: #{tpu_custom_call.1} parent=5 // pred_check_branch
        %282 = sbr.rel (%p280) target = $region48
      $region47: #{tpu_custom_call.1} parent=5 // pred_region
        %s283 = ssub.s32 %s19, 2
        // Predicated region
        $region49: #{tpu_custom_call.1} parent=47 // pred_check
          %p284 = pneg %p109
        $region50: #{tpu_custom_call.1} parent=47 // pred_check_branch
          %286 = sbr.rel (%p284) target = $region52
        $region51: #{tpu_custom_call.1} parent=47 // pred_region
          %s287 = sand.u32 %s94, 1
          %s288 = scalar_lea.sflag [#allocation4], %s287
          %s289 = sand.u32 %s94, 1
          %s290 = scalar_lea.vmem [#allocation5], %s289
          %291 = dma.done %s288, 16
        $region52: #{tpu_custom_call.1} parent=47 // pred_fallthru
          _
        // Predicated region
        $region53: #{tpu_custom_call.1} parent=47 // pred_check
          %p292 = pneg %p135
        $region54: #{tpu_custom_call.1} parent=47 // pred_check_branch
          %294 = sbr.rel (%p292) target = $region56
        $region55: #{tpu_custom_call.1} parent=47 // pred_region
          %s295 = sand.u32 %s120, 1
          %s296 = scalar_lea.sflag [#allocation7], %s295
          %s297 = sand.u32 %s120, 1
          %s298 = scalar_lea.vmem [#allocation6], %s297
          %299 = dma.done %s296, 16
        $region56: #{tpu_custom_call.1} parent=47 // pred_fallthru
          _
      $region48: #{tpu_custom_call.1} parent=5 // pred_fallthru
        _
    $region6: #{tpu_custom_call.1} parent=1 // loop_footer
      %s23 = sadd.s32 1, %s19
    $region7: #{tpu_custom_call.1} parent=1 // loop_footer_branch
      %18 = sbr.rel target = $region3
    $region8: #{tpu_custom_call.1} parent=1 // loop_exit
      _
    %300 = vsyncpa [#allocation3], 1
    %s301 = scalar_lea.sflag [#allocation3], 1
    %302 = vsyncpa %s301, 1
    %303 = vsyncpa [#allocation4], 1
    %s304 = scalar_lea.sflag [#allocation4], 1
    %305 = vsyncpa %s304, 1
    %306 = vsyncpa [#allocation7], 1
    %s307 = scalar_lea.sflag [#allocation7], 1
    %308 = vsyncpa %s307, 1

</llo_original>
